<compile_context>
chip_gen: v7x
topology: tpu7x:2x2x1
jax: 0.10.0
libtpu: 0.0.40
codegen_flags: <defaults>
</compile_context>

<pallas_src>
import math

import jax
import jax.numpy as jnp
from jax.experimental import pallas as pl
from jax.experimental.pallas import tpu as pltpu


_LANES = 128
_SUBLANES = 8
# Double-buffered (input + output) block budget; generation-safe
# (v7x physical VMEM is 64 MiB, v5e/v6e have 128 MiB).
_BLOCK_BUDGET_BYTES = 24 * 1024 * 1024
_VMEM_LIMIT_BYTES = 48 * 1024 * 1024


def _round_up(a, m):
    return ((a + m - 1) // m) * m


def _temporal_filter_kernel(f_ref, x_ref, o_ref):
    # f_ref: (T,)               f32 filter weights in SMEM
    # x_ref: (1, T, R_TILE, 128) input slab in VMEM (dense per-timestep slabs)
    # o_ref: (1, R_TILE, 128)    output slab in VMEM (lane- and sublane-dense)
    T = x_ref.shape[1]
    acc = x_ref[0, 0].astype(jnp.float32) * f_ref[0]
    for t in range(1, T):                       # static unroll (T is small)
        acc = acc + x_ref[0, t].astype(jnp.float32) * f_ref[t]
    o_ref[0] = acc.astype(o_ref.dtype)


def temporal_filter(x, filt):
    """x: (B, T, *spatial); filt: (T, 1, ..., 1) -> (B, *spatial)."""
    B, T = x.shape[0], x.shape[1]
    spatial_shape = x.shape[2:]
    HW = math.prod(spatial_shape)

    f1 = filt.reshape(T).astype(jnp.float32)        # (T,) scalar weights

    # Dense lane layout: flatten spatial, pad only the lane axis to a multiple
    # of 128 (tiny / usually a no-op), fold out the 128-lane axis explicitly.
    HW_128 = _round_up(HW, _LANES)
    x2 = x.reshape(B, T, HW)
    if HW_128 != HW:
        x2 = jnp.pad(x2, ((0, 0), (0, 0), (0, HW_128 - HW)))
    R = HW_128 // _LANES
    x2 = x2.reshape(B, T, R, _LANES)

    itemsize = jnp.dtype(x.dtype).itemsize
    # Row-tile cap from the double-buffered (in + out) VMEM budget, as a
    # function of T and dtype (so larger T / wider dtypes shrink the tile).
    bytes_per_row = 2 * _LANES * (T * itemsize + itemsize)
    cap = max(_SUBLANES,
              (_BLOCK_BUDGET_BYTES // bytes_per_row) // _SUBLANES * _SUBLANES)

    if R <= cap:
        r_tile, n_tiles = R, 1          # single tile: block dim == array dim
    else:
        n_tiles = pl.cdiv(R, cap)
        r_tile = _round_up(pl.cdiv(R, n_tiles), _SUBLANES)
        n_tiles = pl.cdiv(R, r_tile)    # ragged last tile: Pallas masks writeback

    # v7x megacore: "parallel" grid axes are sharded across 2 TensorCores;
    # guarantee >= 2 grid steps whenever the data allows it.
    if B * n_tiles < 2 and R >= 2 * _SUBLANES:
        r_tile = _round_up(pl.cdiv(R, 2), _SUBLANES)
        n_tiles = pl.cdiv(R, r_tile)

    out = pl.pallas_call(
        _temporal_filter_kernel,
        out_shape=jax.ShapeDtypeStruct((B, R, _LANES), x.dtype),
        grid_spec=pltpu.PrefetchScalarGridSpec(
            num_scalar_prefetch=0,
            grid=(B, n_tiles),
            in_specs=[
                # tiny filter -> SMEM, resident across all grid steps
                pl.BlockSpec(memory_space=pltpu.MemorySpace.SMEM),
                # one dense (T, r_tile, 128) slab of one batch element / step
                pl.BlockSpec((1, T, r_tile, _LANES), lambda b, s: (b, 0, s, 0)),
            ],
            out_specs=pl.BlockSpec((1, r_tile, _LANES), lambda b, s: (b, s, 0)),
        ),
        compiler_params=pltpu.CompilerParams(
            dimension_semantics=("parallel", "parallel"),
            vmem_limit_bytes=_VMEM_LIMIT_BYTES,
        ),
        cost_estimate=pl.CostEstimate(
            flops=2 * B * T * HW_128,
            transcendentals=0,
            bytes_accessed=B * (T + 1) * HW_128 * itemsize,
        ),
    )(f1, x2)

    return out.reshape(B, HW_128)[:, :HW].reshape((B,) + spatial_shape)


if __name__ == "__main__":
    # Module config: tem_len=8, spatial=2  -> filter shape (8, 1, 1)
    tem_len, spatial = 8, 2
    B, H, W = 2, 16, 16

    key = jax.random.PRNGKey(0)
    kf, kx = jax.random.split(key)

    # deterministic init mirroring torch.rand (uniform [0, 1))
    filt = jax.random.uniform(kf, (tem_len, 1, 1), dtype=jnp.float32)
    x = jax.random.normal(kx, (B, tem_len, H, W), dtype=jnp.float32)

    out = jax.block_until_ready(temporal_filter(x, filt))
    ref = (x * filt[None]).sum(axis=-spatial - 1)
    assert out.shape == (B, H, W)
    assert jnp.allclose(out, ref, atol=1e-5, rtol=1e-5)

    # spatial extent that is NOT a multiple of 128 (exercises lane padding)
    H2, W2 = 9, 11
    x_odd = jax.random.normal(kx, (B, tem_len, H2, W2), dtype=jnp.float32)
    out_odd = jax.block_until_ready(temporal_filter(x_odd, filt))
    ref_odd = (x_odd * filt[None]).sum(axis=-spatial - 1)
    assert out_odd.shape == (B, H2, W2)
    assert jnp.allclose(out_odd, ref_odd, atol=1e-5, rtol=1e-5)

    print("KERNEL_OK")
</pallas_src>

<mosaic_0001>
module attributes {stable_mosaic.version = 11 : i64} {
  func.func @_temporal_filter_kernel(%arg0: i32, %arg1: i32, %arg2: memref<8xf32, #tpu.memory_space<smem>>, %arg3: memref<1x8x2x128xf32, #tpu.memory_space<vmem>>, %arg4: memref<1x2x128xf32, #tpu.memory_space<vmem>>) attributes {dimension_semantics = [#tpu.dimension_semantics<parallel>, #tpu.dimension_semantics<parallel>], iteration_bounds = array<i64: 2, 1>, scalar_prefetch = 0 : i64, scratch_operands = 0 : i64, tpu.core_type = #tpu.core_type<tc>, window_params = [{transform_indices = @transform_0, window_bounds = array<i64: 8>}, {transform_indices = @transform_1, window_bounds = array<i64: 1, 8, 2, 128>}, {transform_indices = @transform_2, window_bounds = array<i64: 1, 2, 128>}]} {
    %c0 = arith.constant 0 : index
    %c0_0 = arith.constant 0 : index
    %c0_1 = arith.constant 0 : index
    %c0_2 = arith.constant 0 : index
    %0 = vector.load %arg3[%c0, %c0_0, %c0_1, %c0_2] : memref<1x8x2x128xf32, #tpu.memory_space<vmem>>, vector<1x1x2x128xf32>
    %1 = vector.shape_cast %0 : vector<1x1x2x128xf32> to vector<2x128xf32>
    %c0_3 = arith.constant 0 : index
    %2 = memref.load %arg2[%c0_3] : memref<8xf32, #tpu.memory_space<smem>>
    %3 = vector.broadcast %2 : f32 to vector<2x128xf32>
    %4 = arith.mulf %1, %3 : vector<2x128xf32>
    %c0_4 = arith.constant 0 : index
    %c1 = arith.constant 1 : index
    %c0_5 = arith.constant 0 : index
    %c0_6 = arith.constant 0 : index
    %5 = vector.load %arg3[%c0_4, %c1, %c0_5, %c0_6] : memref<1x8x2x128xf32, #tpu.memory_space<vmem>>, vector<1x1x2x128xf32>
    %6 = vector.shape_cast %5 : vector<1x1x2x128xf32> to vector<2x128xf32>
    %c1_7 = arith.constant 1 : index
    %7 = memref.load %arg2[%c1_7] : memref<8xf32, #tpu.memory_space<smem>>
    %8 = vector.broadcast %7 : f32 to vector<2x128xf32>
    %9 = arith.mulf %6, %8 : vector<2x128xf32>
    %10 = arith.addf %4, %9 : vector<2x128xf32>
    %c0_8 = arith.constant 0 : index
    %c2 = arith.constant 2 : index
    %c0_9 = arith.constant 0 : index
    %c0_10 = arith.constant 0 : index
    %11 = vector.load %arg3[%c0_8, %c2, %c0_9, %c0_10] : memref<1x8x2x128xf32, #tpu.memory_space<vmem>>, vector<1x1x2x128xf32>
    %12 = vector.shape_cast %11 : vector<1x1x2x128xf32> to vector<2x128xf32>
    %c2_11 = arith.constant 2 : index
    %13 = memref.load %arg2[%c2_11] : memref<8xf32, #tpu.memory_space<smem>>
    %14 = vector.broadcast %13 : f32 to vector<2x128xf32>
    %15 = arith.mulf %12, %14 : vector<2x128xf32>
    %16 = arith.addf %10, %15 : vector<2x128xf32>
    %c0_12 = arith.constant 0 : index
    %c3 = arith.constant 3 : index
    %c0_13 = arith.constant 0 : index
    %c0_14 = arith.constant 0 : index
    %17 = vector.load %arg3[%c0_12, %c3, %c0_13, %c0_14] : memref<1x8x2x128xf32, #tpu.memory_space<vmem>>, vector<1x1x2x128xf32>
    %18 = vector.shape_cast %17 : vector<1x1x2x128xf32> to vector<2x128xf32>
    %c3_15 = arith.constant 3 : index
    %19 = memref.load %arg2[%c3_15] : memref<8xf32, #tpu.memory_space<smem>>
    %20 = vector.broadcast %19 : f32 to vector<2x128xf32>
    %21 = arith.mulf %18, %20 : vector<2x128xf32>
    %22 = arith.addf %16, %21 : vector<2x128xf32>
    %c0_16 = arith.constant 0 : index
    %c4 = arith.constant 4 : index
    %c0_17 = arith.constant 0 : index
    %c0_18 = arith.constant 0 : index
    %23 = vector.load %arg3[%c0_16, %c4, %c0_17, %c0_18] : memref<1x8x2x128xf32, #tpu.memory_space<vmem>>, vector<1x1x2x128xf32>
    %24 = vector.shape_cast %23 : vector<1x1x2x128xf32> to vector<2x128xf32>
    %c4_19 = arith.constant 4 : index
    %25 = memref.load %arg2[%c4_19] : memref<8xf32, #tpu.memory_space<smem>>
    %26 = vector.broadcast %25 : f32 to vector<2x128xf32>
    %27 = arith.mulf %24, %26 : vector<2x128xf32>
    %28 = arith.addf %22, %27 : vector<2x128xf32>
    %c0_20 = arith.constant 0 : index
    %c5 = arith.constant 5 : index
    %c0_21 = arith.constant 0 : index
    %c0_22 = arith.constant 0 : index
    %29 = vector.load %arg3[%c0_20, %c5, %c0_21, %c0_22] : memref<1x8x2x128xf32, #tpu.memory_space<vmem>>, vector<1x1x2x128xf32>
    %30 = vector.shape_cast %29 : vector<1x1x2x128xf32> to vector<2x128xf32>
    %c5_23 = arith.constant 5 : index
    %31 = memref.load %arg2[%c5_23] : memref<8xf32, #tpu.memory_space<smem>>
    %32 = vector.broadcast %31 : f32 to vector<2x128xf32>
    %33 = arith.mulf %30, %32 : vector<2x128xf32>
    %34 = arith.addf %28, %33 : vector<2x128xf32>
    %c0_24 = arith.constant 0 : index
    %c6 = arith.constant 6 : index
    %c0_25 = arith.constant 0 : index
    %c0_26 = arith.constant 0 : index
    %35 = vector.load %arg3[%c0_24, %c6, %c0_25, %c0_26] : memref<1x8x2x128xf32, #tpu.memory_space<vmem>>, vector<1x1x2x128xf32>
    %36 = vector.shape_cast %35 : vector<1x1x2x128xf32> to vector<2x128xf32>
    %c6_27 = arith.constant 6 : index
    %37 = memref.load %arg2[%c6_27] : memref<8xf32, #tpu.memory_space<smem>>
    %38 = vector.broadcast %37 : f32 to vector<2x128xf32>
    %39 = arith.mulf %36, %38 : vector<2x128xf32>
    %40 = arith.addf %34, %39 : vector<2x128xf32>
    %c0_28 = arith.constant 0 : index
    %c7 = arith.constant 7 : index
    %c0_29 = arith.constant 0 : index
    %c0_30 = arith.constant 0 : index
    %41 = vector.load %arg3[%c0_28, %c7, %c0_29, %c0_30] : memref<1x8x2x128xf32, #tpu.memory_space<vmem>>, vector<1x1x2x128xf32>
    %42 = vector.shape_cast %41 : vector<1x1x2x128xf32> to vector<2x128xf32>
    %c7_31 = arith.constant 7 : index
    %43 = memref.load %arg2[%c7_31] : memref<8xf32, #tpu.memory_space<smem>>
    %44 = vector.broadcast %43 : f32 to vector<2x128xf32>
    %45 = arith.mulf %42, %44 : vector<2x128xf32>
    %46 = arith.addf %40, %45 : vector<2x128xf32>
    %c0_32 = arith.constant 0 : index
    %c0_33 = arith.constant 0 : index
    %c0_34 = arith.constant 0 : index
    %47 = vector.load %arg4[%c0_32, %c0_33, %c0_34] : memref<1x2x128xf32, #tpu.memory_space<vmem>>, vector<1x2x128xf32>
    %48 = vector.shape_cast %47 : vector<1x2x128xf32> to vector<2x128xf32>
    %49 = vector.shape_cast %46 : vector<2x128xf32> to vector<1x2x128xf32>
    tpu.vector_store %arg4[%c0_32, %c0_33, %c0_34], %49 {strides = array<i32>} : memref<1x2x128xf32, #tpu.memory_space<vmem>>, vector<1x2x128xf32>,
    return
  }
  func.func @transform_0(%arg0: i32, %arg1: i32) -> i32 {
    %c0_i32 = arith.constant 0 : i32
    %c0_i32_0 = arith.constant 0 : i32
    return %c0_i32 : i32
  }
  func.func @transform_1(%arg0: i32, %arg1: i32) -> (i32, i32, i32, i32) {
    %c0_i32 = arith.constant 0 : i32
    %c0_i32_0 = arith.constant 0 : i32
    %c0_i32_1 = arith.constant 0 : i32
    return %arg0, %c0_i32, %arg1, %c0_i32_0 : i32, i32, i32, i32
  }
  func.func @transform_2(%arg0: i32, %arg1: i32) -> (i32, i32, i32) {
    %c0_i32 = arith.constant 0 : i32
    %c0_i32_0 = arith.constant 0 : i32
    return %arg0, %arg1, %c0_i32 : i32, i32, i32
  }
}

</mosaic_0001>

<llo_original>
// kernel: tpu_custom_call.1
$region0: #{tpu_custom_call.1}
  #allocation0 [shape = 'u32[]', space=smem, size = 0x4, offset = 0x4, fixed_abs, tag = 'smem constant byte address 0x4 - core index']
  #allocation1 [shape = 'u32[144,128]{1,0:T(1,128)}', space=vmem, size = 0x12000, scoped, tag = 'internal scratch']
  %s0 = inlined_call_operand.hbm [shape: f32[8], index: 0, kind: input, shape index: {}]
  %s1 = inlined_call_operand.hbm [shape: f32[2,8,2,128], index: 1, kind: input, shape index: {}]
  %s2 = inlined_call_operand.hbm [shape: f32[2,2,128], index: 2, kind: output, shape index: {}]
  %s3 = sld [smem:[#allocation0]]
  $region49: #{tpu_custom_call.1} parent=0
    _
  %s5 = ssub.s32 1, %s3
  %s6 = scalar_select 0, %s5, %s3
  $region1: #{tpu_custom_call.1} parent=0
    #allocation2 [shape = 'u8[512]{0}', space=smem, size = 0x200, scoped, tag = 'input window, operand 0, single buffered']
    #allocation3 [shape = 's32[2]{0}', space=sflag, size = 0x8, scoped, tag = 'scoped memory for tpu_custom_call.1']
    #allocation4 [shape = 's32[2]{0}', space=sflag, size = 0x8, scoped, tag = 'scoped memory for tpu_custom_call.1']
    #allocation5 [shape = 's32[2]{0}', space=sflag, size = 0x8, scoped, tag = 'scoped memory for tpu_custom_call.1']
    #allocation6 [shape = 'u8[16384]{0}', space=vmem, size = 0x4000, scoped, tag = 'input window, operand 1']
    #allocation7 [shape = 'u8[2048]{0}', space=vmem, size = 0x800, scoped, tag = 'output window, operand 0']
    %7 = vsyncpa [#allocation5], 0
    %8 = vsyncpa [#allocation3], 0
    %s9 = scalar_lea.sflag [#allocation3], 1
    %10 = vsyncpa %s9, 0
    %11 = vsyncpa [#allocation4], 0
    %s12 = scalar_lea.sflag [#allocation4], 1
    %13 = vsyncpa %s12, 0
    loop: start=0, step=1, limit=4
    $region2: #{tpu_custom_call.1} parent=1 // loop_pre_header
      _
    $region3: #{tpu_custom_call.1} parent=1 // loop_header
      %s15 = sphi 0, %s19
      %p16 = scmp.ge.s32.totalorder %s15, 4
      %s22 = sphi 0, %s34
      %s23 = sphi 0, %s30
      %s24 = sphi 0, %s22
      %s25 = sphi 0, %s23
      %s26 = sphi 0, %s24
      %s27 = sphi 0, %s25
      %s35 = sphi 0, %s35
      %s37 = sphi 0, %s35
      %s38 = sphi 0, %s37
      %s52 = sphi 0, %s38
      %s60 = sphi 0, %s62
      %s63 = sphi 0, %s60
      %s64 = sphi 0, %s63
      %s80 = sphi 0, %s64
      %s88 = sphi 0, %s90
      %s91 = sphi 0, %s88
      %s92 = sphi 0, %s91
      %s108 = sphi 0, %s92
    $region4: #{tpu_custom_call.1} parent=1 // loop_header_branch
      %18 = sbr.rel (%p16) target = $region8
    $region5: #{tpu_custom_call.1} parent=1 // loop_body
      %s20 = ssub.s32 %s15, 1
      %s21 = ssub.s32 %s15, 2
      %s28 = sadd.s32 1, %s23
      %p29 = scmp.ge.s32.totalorder %s28, 1
      %s30 = scalar_select %p29, 0, %s28
      %s31 = sadd.s32 1, %s22
      %s32 = scalar_select %p29, %s31, %s22
      %p33 = scmp.ge.s32.totalorder %s32, 2
      %s34 = scalar_select %p33, 0, %s32
      %s36 = sadd.s32 %s35, 1
      %p39 = scmp.eq.s32.totalorder %s15, 1
      %p40 = scmp.ne.s32.totalorder %s35, %s37
      %p41 = scmp.eq.s32.totalorder %s15, 0
      %p42 = por %p40, %p41
      %p43 = scmp.ne.s32.totalorder %s35, %s37
      %p44 = scmp.eq.s32.totalorder %s20, 1
      %p45 = por %p43, %p44
      %p46 = scmp.ne.s32.totalorder %s37, %s38
      %p47 = scmp.eq.s32.totalorder %s20, 0
      %p48 = por %p46, %p47
      %p49 = scmp.ne.s32.totalorder %s37, %s38
      %p50 = scmp.eq.s32.totalorder %s21, 1
      %p51 = por %p49, %p50
      %p53 = scmp.ne.s32.totalorder %s38, %s52
      %p54 = scmp.eq.s32.totalorder %s21, 0
      %p55 = por %p53, %p54
      %s56 = ssub.s32 %s22, %s34
      %s57 = ssub.s32 %s23, %s30
      %s58 = sor.u32 %s56, %s57
      %p59 = scmp.eq.s32.totalorder %s58, 0
      %s61 = sadd.s32 %s60, 1
      %s62 = scalar_select %p59, %s60, %s61
      %p65 = pneg %p59
      %p66 = scmp.eq.s32.totalorder %s15, 1
      %p67 = por %p65, %p66
      %p68 = scmp.ne.s32.totalorder %s60, %s63
      %p69 = scmp.eq.s32.totalorder %s15, 0
      %p70 = por %p68, %p69
      %p71 = scmp.ne.s32.totalorder %s60, %s63
      %p72 = scmp.eq.s32.totalorder %s20, 1
      %p73 = por %p71, %p72
      %p74 = scmp.ne.s32.totalorder %s63, %s64
      %p75 = scmp.eq.s32.totalorder %s20, 0
      %p76 = por %p74, %p75
      %p77 = scmp.ne.s32.totalorder %s63, %s64
      %p78 = scmp.eq.s32.totalorder %s21, 1
      %p79 = por %p77, %p78
      %p81 = scmp.ne.s32.totalorder %s64, %s80
      %p82 = scmp.eq.s32.totalorder %s21, 0
      %p83 = por %p81, %p82
      %s84 = ssub.s32 %s22, %s34
      %s85 = ssub.s32 %s23, %s30
      %s86 = sor.u32 %s84, %s85
      %p87 = scmp.eq.s32.totalorder %s86, 0
      %s89 = sadd.s32 %s88, 1
      %s90 = scalar_select %p87, %s88, %s89
      %p93 = pneg %p87
      %p94 = scmp.eq.s32.totalorder %s15, 1
      %p95 = por %p93, %p94
      %p96 = scmp.ne.s32.totalorder %s88, %s91
      %p97 = scmp.eq.s32.totalorder %s15, 0
      %p98 = por %p96, %p97
      %p99 = scmp.ne.s32.totalorder %s88, %s91
      %p100 = scmp.eq.s32.totalorder %s20, 1
      %p101 = por %p99, %p100
      %p102 = scmp.ne.s32.totalorder %s91, %s92
      %p103 = scmp.eq.s32.totalorder %s20, 0
      %p104 = por %p102, %p103
      %p105 = scmp.ne.s32.totalorder %s91, %s92
      %p106 = scmp.eq.s32.totalorder %s21, 1
      %p107 = por %p105, %p106
      %p109 = scmp.ne.s32.totalorder %s92, %s108
      %p110 = scmp.eq.s32.totalorder %s21, 0
      %p111 = por %p109, %p110
      %p112 = scmp.le.s32.totalorder 1, %s15
      %p113 = scmp.lt.s32.totalorder %s15, 3
      %p114 = pnand %p112, %p113
      %p115 = pneg %p114
      // Predicated region
      $region9: #{tpu_custom_call.1} parent=5 // pred_check
        _
      $region10: #{tpu_custom_call.1} parent=5 // pred_check_branch
        %117 = sbr.rel (%p114) target = $region12
      $region11: #{tpu_custom_call.1} parent=5 // pred_region
        %s118 = ssub.s32 %s15, 1
        // Predicated region
        $region13: #{tpu_custom_call.1} parent=11 // pred_check
          %p119 = pneg %p48
        $region14: #{tpu_custom_call.1} parent=11 // pred_check_branch
          %121 = sbr.rel (%p119) target = $region16
        $region15: #{tpu_custom_call.1} parent=11 // pred_region
          %s123 = ssub.s32 16, 16
          %124 = vsyncadd [#allocation5], %s123
          %127 = dma.hbm_to_smem %s0, 16, [#allocation2], [#allocation5]
        $region16: #{tpu_custom_call.1} parent=11 // pred_fallthru
          _
      $region12: #{tpu_custom_call.1} parent=5 // pred_fallthru
        _
      %p128 = scmp.lt.s32.totalorder %s15, 2
      // Predicated region
      $region17: #{tpu_custom_call.1} parent=5 // pred_check
        %p129 = pneg %p128
      $region18: #{tpu_custom_call.1} parent=5 // pred_check_branch
        %131 = sbr.rel (%p129) target = $region20
      $region19: #{tpu_custom_call.1} parent=5 // pred_region
        // Predicated region
        $region21: #{tpu_custom_call.1} parent=19 // pred_check
          %p132 = pneg %p70
        $region22: #{tpu_custom_call.1} parent=19 // pred_check_branch
          %134 = sbr.rel (%p132) target = $region24
        $region23: #{tpu_custom_call.1} parent=19 // pred_region
          %s135 = sand.u32 %s60, 1
          %s136 = scalar_lea.sflag [#allocation3], %s135
          %s137 = sand.u32 %s60, 1
          %s138 = smul.addr %s137, 16
          %s139 = scalar_lea.vmem [#allocation6], %s138
          %s141 = ssub.s32 256, 256
          %142 = vsyncadd %s136, %s141
          %s143 = smul.addr %s22, 8
          %s144 = sadd.s32 %s23, %s143
          %s145 = smul.addr %s144, 32
          %s146 = scalar_lea.hbm %s1, %s145
          %s147 = sshll.u32 %s139, 4
          %s148 = int_to_ptr.vmem [resolvable:$true] %s147
          %153 = dma.hbm_to_vmem [thread:$0]  %s146, 256, %s148, %s136, 32, 32, 2
        $region24: #{tpu_custom_call.1} parent=19 // pred_fallthru
          _
      $region20: #{tpu_custom_call.1} parent=5 // pred_fallthru
        _
      %p154 = scmp.le.s32.totalorder 1, %s15
      %p155 = scmp.lt.s32.totalorder %s15, 3
      %p156 = pnand %p154, %p155
      %p157 = pneg %p156
      // Predicated region
      $region25: #{tpu_custom_call.1} parent=5 // pred_check
        _
      $region26: #{tpu_custom_call.1} parent=5 // pred_check_branch
        %159 = sbr.rel (%p156) target = $region28
      $region27: #{tpu_custom_call.1} parent=5 // pred_region
        %s160 = ssub.s32 %s15, 1
        // Predicated region
        $region29: #{tpu_custom_call.1} parent=27 // pred_check
          %p161 = pneg %p48
        $region30: #{tpu_custom_call.1} parent=27 // pred_check_branch
          %163 = sbr.rel (%p161) target = $region32
        $region31: #{tpu_custom_call.1} parent=27 // pred_region
          %164 = dma.done [#allocation5], 16
        $region32: #{tpu_custom_call.1} parent=27 // pred_fallthru
          _
        %s165 = sand.u32 %s63, 1
        %s166 = scalar_lea.sflag [#allocation3], %s165
        %s167 = sand.u32 %s63, 1
        %s168 = smul.addr %s167, 16
        %s169 = scalar_lea.vmem [#allocation6], %s168
        // Predicated region
        $region33: #{tpu_custom_call.1} parent=27 // pred_check
          %p170 = pneg %p76
        $region34: #{tpu_custom_call.1} parent=27 // pred_check_branch
          %172 = sbr.rel (%p170) target = $region36
        $region35: #{tpu_custom_call.1} parent=27 // pred_region
          %173 = dma.done %s166, 256
        $region36: #{tpu_custom_call.1} parent=27 // pred_fallthru
          _
        %174 = sfence
        %p175 = pneg %p48
        %p176 = pneg %p45
        %s177 = sand.u32 %s63, 1
        %s178 = scalar_lea.sflag [#allocation3], %s177
        %s179 = sand.u32 %s63, 1
        %s180 = smul.addr %s179, 16
        %s181 = scalar_lea.vmem [#allocation6], %s180
        %p182 = pneg %p76
        %p183 = pneg %p73
        %p184 = pneg %p104
        %p185 = pneg %p101
        %s186 = sand.u32 %s91, 1
        %s187 = scalar_lea.sflag [#allocation4], %s186
        %s188 = sand.u32 %s91, 1
        %s189 = smul.addr %s188, 2
        %s190 = scalar_lea.vmem [#allocation7], %s189
        %v191 = vld [vmem:[%s169] sm:$0x3]
        %s192 = sld [smem:[#allocation2]]
        %v193 = vstv %s192
        %v194 = vmul.f32 %v191, %v193
        %s195 = scalar_lea.vmem %s169, 2 [#allocation6]
        %v196 = vld [vmem:[%s195] sm:$0x3]
        %s197 = sld [smem:[#allocation2 + $0x1]]
        %v198 = vstv %s197
        %v199 = vmul.f32 %v196, %v198
        %v200 = vadd.f32 %v194, %v199
        %s201 = scalar_lea.vmem %s169, 4 [#allocation6]
        %v202 = vld [vmem:[%s201] sm:$0x3]
        %s203 = sld [smem:[#allocation2 + $0x2]]
        %v204 = vstv %s203
        %v205 = vmul.f32 %v202, %v204
        %v206 = vadd.f32 %v200, %v205
        %s207 = scalar_lea.vmem %s169, 6 [#allocation6]
        %v208 = vld [vmem:[%s207] sm:$0x3]
        %s209 = sld [smem:[#allocation2 + $0x3]]
        %v210 = vstv %s209
        %v211 = vmul.f32 %v208, %v210
        %v212 = vadd.f32 %v206, %v211
        %s213 = scalar_lea.vmem %s169, 8 [#allocation6]
        %v214 = vld [vmem:[%s213] sm:$0x3]
        %s215 = sld [smem:[#allocation2 + $0x4]]
        %v216 = vstv %s215
        %v217 = vmul.f32 %v214, %v216
        %v218 = vadd.f32 %v212, %v217
        %s219 = scalar_lea.vmem %s169, 10 [#allocation6]
        %v220 = vld [vmem:[%s219] sm:$0x3]
        %s221 = sld [smem:[#allocation2 + $0x5]]
        %v222 = vstv %s221
        %v223 = vmul.f32 %v220, %v222
        %v224 = vadd.f32 %v218, %v223
        %s225 = scalar_lea.vmem %s169, 12 [#allocation6]
        %v226 = vld [vmem:[%s225] sm:$0x3]
        %s227 = sld [smem:[#allocation2 + $0x6]]
        %v228 = vstv %s227
        %v229 = vmul.f32 %v226, %v228
        %v230 = vadd.f32 %v224, %v229
        %s231 = scalar_lea.vmem %s169, 14 [#allocation6]
        %v232 = vld [vmem:[%s231] sm:$0x3]
        %s233 = sld [smem:[#allocation2 + $0x7]]
        %v234 = vstv %s233
        %v235 = vmul.f32 %v232, %v234
        %v236 = vadd.f32 %v230, %v235
        %237 = vst [vmem:[%s190] sm:$0x3] %v236
        %s238 = sand.u32 %s91, 1
        %s239 = scalar_lea.sflag [#allocation4], %s238
        %s240 = sand.u32 %s91, 1
        %s241 = smul.addr %s240, 2
        %s242 = scalar_lea.vmem [#allocation7], %s241
        // Predicated region
        $region37: #{tpu_custom_call.1} parent=27 // pred_check
          %p243 = pneg %p101
        $region38: #{tpu_custom_call.1} parent=27 // pred_check_branch
          %245 = sbr.rel (%p243) target = $region40
        $region39: #{tpu_custom_call.1} parent=27 // pred_region
          %s247 = ssub.s32 32, 32
          %248 = vsyncadd %s239, %s247
          %s249 = sadd.s32 %s25, %s24
          %s250 = smul.addr %s249, 32
          %s251 = scalar_lea.hbm %s2, %s250
          %s253 = sshll.u32 %s242, 4
          %s254 = int_to_ptr.vmem [resolvable:$true] %s253
          %256 = dma.vmem_to_hbm [thread:$0]  %s254, 32, %s251, %s239
        $region40: #{tpu_custom_call.1} parent=27 // pred_fallthru
          _
      $region28: #{tpu_custom_call.1} parent=5 // pred_fallthru
        _
      %p257 = scmp.le.s32.totalorder 2, %s15
      // Predicated region
      $region41: #{tpu_custom_call.1} parent=5 // pred_check
        %p258 = pneg %p257
      $region42: #{tpu_custom_call.1} parent=5 // pred_check_branch
        %260 = sbr.rel (%p258) target = $region44
      $region43: #{tpu_custom_call.1} parent=5 // pred_region
        %s261 = ssub.s32 %s15, 2
        // Predicated region
        $region45: #{tpu_custom_call.1} parent=43 // pred_check
          %p262 = pneg %p107
        $region46: #{tpu_custom_call.1} parent=43 // pred_check_branch
          %264 = sbr.rel (%p262) target = $region48
        $region47: #{tpu_custom_call.1} parent=43 // pred_region
          %s265 = sand.u32 %s92, 1
          %s266 = scalar_lea.sflag [#allocation4], %s265
          %s267 = sand.u32 %s92, 1
          %s268 = smul.addr %s267, 2
          %s269 = scalar_lea.vmem [#allocation7], %s268
          %270 = dma.done %s266, 32
        $region48: #{tpu_custom_call.1} parent=43 // pred_fallthru
          _
      $region44: #{tpu_custom_call.1} parent=5 // pred_fallthru
        _
    $region6: #{tpu_custom_call.1} parent=1 // loop_footer
      %s19 = sadd.s32 1, %s15
    $region7: #{tpu_custom_call.1} parent=1 // loop_footer_branch
      %14 = sbr.rel target = $region3
    $region8: #{tpu_custom_call.1} parent=1 // loop_exit
      _
    %271 = vsyncpa [#allocation3], 1
    %s272 = scalar_lea.sflag [#allocation3], 1
    %273 = vsyncpa %s272, 1
    %274 = vsyncpa [#allocation4], 1
    %s275 = scalar_lea.sflag [#allocation4], 1
    %276 = vsyncpa %s275, 1
    %277 = vsyncpa [#allocation5], 1
    %s278 = scalar_lea.sflag [#allocation5], 1
    %279 = vsyncpa %s278, 1

</llo_original>
